<compile_context>
chip_gen: v5e
topology: v5e:2x2
jax: 0.10.0
libtpu: 0.0.40
codegen_flags: <defaults>
</compile_context>

<pallas_src>
import functools

import jax
import jax.numpy as jnp
from jax.experimental import pallas as pl
from jax.experimental.pallas import tpu as pltpu


def _round_up(x, m):
    return ((x + m - 1) // m) * m


def _choose_row_tile(n):
    """Largest row tile <= 512 (multiple of 8); prefer >= 2 grid steps."""
    nm = _round_up(max(int(n), 1), 8)
    tm = min(512, nm)
    if nm > 8 and nm // tm < 2:
        tm = max(8, _round_up((nm + 1) // 2, 8))
    return tm


# ------------------------------ kernels -------------------------------------


def _dl_kernel_bias(x_ref, w_ref, b_ref, o_ref):
    # x_ref: (tm, K)  w_ref: (K, tn)  b_ref: (1, tn)  o_ref: (tm, tn)
    acc = jnp.dot(x_ref[...], w_ref[...], preferred_element_type=jnp.float32)
    o_ref[...] = (acc + b_ref[...]).astype(o_ref.dtype)


def _dl_kernel_nobias(x_ref, w_ref, o_ref):
    acc = jnp.dot(x_ref[...], w_ref[...], preferred_element_type=jnp.float32)
    o_ref[...] = acc.astype(o_ref.dtype)


def _resident_spec(block_shape, index_map, single_buffer):
    """BlockSpec for the (small, grid-constant) weight/bias blocks.

    Single-buffer them to halve their VMEM footprint; fall back to the default
    double-buffered spec on jax versions without the pipeline_mode kwarg.
    """
    if single_buffer:
        try:
            return pl.BlockSpec(block_shape, index_map,
                                pipeline_mode=pl.Buffered(1))
        except (TypeError, AttributeError):
            pass
    return pl.BlockSpec(block_shape, index_map)


# --------------------------- pallas_call wrapper -----------------------------


@functools.partial(
    jax.jit,
    static_argnames=("tm", "tn", "out_cols", "compute_dtype",
                     "single_buffer_resident"))
def _dynamic_linear_pallas(x, w_pad, b_pad, *, tm, tn, out_cols,
                           compute_dtype, single_buffer_resident):
    """x: [N, K]; w_pad: [K, co_pad] (co_pad % 128 == 0); b_pad: [1, co_pad] or None."""
    n, k = x.shape
    co_pad = w_pad.shape[1]
    out_dtype = x.dtype
    use_bias = b_pad is not None

    # Pad rows so the grid divides evenly (padded rows sliced off below).
    n_pad = _round_up(n, tm)
    if n_pad != n:
        x = jnp.pad(x, ((0, n_pad - n), (0, 0)))

    # Optional reduced-precision MXU inputs (accumulation stays f32).
    cd = jnp.dtype(compute_dtype) if compute_dtype is not None else x.dtype
    xk = x.astype(cd)
    wk = w_pad.astype(cd)

    grid = (n_pad // tm, co_pad // tn)

    x_spec = pl.BlockSpec((tm, k), lambda i, j: (i, 0))
    w_spec = _resident_spec((k, tn), lambda i, j: (0, j), single_buffer_resident)
    o_spec = pl.BlockSpec((tm, tn), lambda i, j: (i, j))

    # VMEM budget: double-buffered x and output, single/double-buffered weight.
    bpe_c = jnp.dtype(cd).itemsize
    bpe_o = jnp.dtype(out_dtype).itemsize
    w_bufs = 1 if single_buffer_resident else 2
    need = (2 * tm * k * bpe_c            # x tiles (double-buffered)
            + w_bufs * k * tn * bpe_c     # weight tile
            + w_bufs * tn * 4             # bias tile (f32)
            + 2 * tm * tn * bpe_o)        # output tiles (double-buffered)
    vmem_limit = int(min(64 << 20, max(32 << 20, 2 * need)))

    compiler_params = pltpu.CompilerParams(
        dimension_semantics=("parallel", "parallel"),
        vmem_limit_bytes=vmem_limit)

    if use_bias:
        b_spec = _resident_spec((1, tn), lambda i, j: (0, j),
                                single_buffer_resident)
        out = pl.pallas_call(
            _dl_kernel_bias,
            out_shape=jax.ShapeDtypeStruct((n_pad, co_pad), out_dtype),
            grid_spec=pltpu.PrefetchScalarGridSpec(
                num_scalar_prefetch=0, grid=grid,
                in_specs=[x_spec, w_spec, b_spec], out_specs=o_spec),
            compiler_params=compiler_params,
        )(xk, wk, b_pad)
    else:
        out = pl.pallas_call(
            _dl_kernel_nobias,
            out_shape=jax.ShapeDtypeStruct((n_pad, co_pad), out_dtype),
            grid_spec=pltpu.PrefetchScalarGridSpec(
                num_scalar_prefetch=0, grid=grid,
                in_specs=[x_spec, w_spec], out_specs=o_spec),
            compiler_params=compiler_params,
        )(xk, wk)

    return out[:n, :out_cols]


# One-time capability check: does this jax/Mosaic accept pl.Buffered(1) on an
# input BlockSpec?  Determined lazily on first use; falls back cleanly.
_SINGLE_BUFFER_OK = None


def _run_dynamic_linear(x, w_pad, b_pad, *, tm, tn, out_cols, compute_dtype):
    global _SINGLE_BUFFER_OK
    want_single = (w_pad.shape[1] // tn) == 1  # weight/bias index_map constant
    if want_single and _SINGLE_BUFFER_OK is None:
        try:
            out = _dynamic_linear_pallas(
                x, w_pad, b_pad, tm=tm, tn=tn, out_cols=out_cols,
                compute_dtype=compute_dtype, single_buffer_resident=True)
            _SINGLE_BUFFER_OK = True
            return out
        except Exception:
            _SINGLE_BUFFER_OK = False
    single = bool(want_single and _SINGLE_BUFFER_OK)
    return _dynamic_linear_pallas(
        x, w_pad, b_pad, tm=tm, tn=tn, out_cols=out_cols,
        compute_dtype=compute_dtype, single_buffer_resident=single)


# ------------------------------- module --------------------------------------


class DynamicLinear:
    """JAX/Pallas port of the PyTorch PVCNN DynamicLinear module."""

    def __init__(self, inc, outc, bias=True, *, key=None, compute_dtype=None):
        self.inc = int(inc)
        self.outc = int(outc)
        self.bias = bool(bias)
        # Optional MXU input dtype (e.g. jnp.bfloat16 for ~2x MXU rate / half the
        # HBM traffic on v5e/v6e/v7x).  Accumulation stays f32 and the output
        # keeps the input dtype.  None => compute in the input dtype (exact f32
        # semantics, matching the PyTorch reference).
        self.compute_dtype = compute_dtype
        if key is None:
            key = jax.random.PRNGKey(0)
        kw, kb = jax.random.split(key)
        # Deterministic init mimicking nn.Linear's U(-1/sqrt(inc), 1/sqrt(inc)).
        bound = 1.0 / (inc ** 0.5)
        self.weight = jax.random.uniform(
            kw, (outc, inc), jnp.float32, minval=-bound, maxval=bound)
        self.bias_param = (
            jax.random.uniform(kb, (outc,), jnp.float32, minval=-bound, maxval=bound)
            if bias else None)
        self.runtime_inc = None
        self.runtime_outc = None
        self.runtime_inc_constraint = None
        self._w_cache = {}

    def __repr__(self):
        return "DynamicLinear(inc=%d, outc=%d)" % (self.inc, self.outc)

    def set_in_channel(self, in_channel=None, constraint=None):
        if in_channel is not None:
            # NOTE: like the PyTorch module, runtime_inc is recorded but the
            # slice width used in forward() comes from inputs.shape[-1].
            self.runtime_inc = int(in_channel)
        elif constraint is not None:
            self.runtime_inc_constraint = tuple(int(i) for i in constraint)
        else:
            raise NotImplementedError
        self._w_cache.clear()

    def set_output_channel(self, out_channel):
        self.runtime_outc = int(out_channel)
        self._w_cache.clear()

    def _prepared_params(self, c):
        """Slice/gather + transpose + lane-pad weight (and bias) once per
        (input width, runtime_outc, constraint) config; cached across forwards."""
        key = (int(c), self.runtime_outc, self.runtime_inc_constraint)
        hit = self._w_cache.get(key)
        if hit is not None:
            return hit

        if self.runtime_inc_constraint is None:
            w = self.weight[:, :c]
        else:
            idx = jnp.asarray(self.runtime_inc_constraint, dtype=jnp.int32)
            w = jnp.take(self.weight, idx, axis=1)
        w = w[: self.runtime_outc, :]                  # [outc_rt, c_sel]
        w_t = jnp.transpose(w, (1, 0))                 # [c_sel, outc_rt]

        co = self.runtime_outc
        co_pad = _round_up(co, 128)                    # lane-dense output columns
        if co_pad != co:
            w_t = jnp.pad(w_t, ((0, 0), (0, co_pad - co)))

        if self.bias:
            b_row = self.bias_param[:co].astype(jnp.float32).reshape(1, co)
            if co_pad != co:
                b_row = jnp.pad(b_row, ((0, 0), (0, co_pad - co)))
        else:
            b_row = None

        w_t = jax.block_until_ready(w_t)               # materialize once, reuse
        if b_row is not None:
            b_row = jax.block_until_ready(b_row)
        self._w_cache[key] = (w_t, b_row)
        return w_t, b_row

    def __call__(self, inputs):
        assert self.runtime_outc is not None
        n, c = inputs.shape
        w_pad, b_row = self._prepared_params(c)
        if w_pad.shape[0] != c:
            raise ValueError(
                "input width %d does not match selected weight width %d"
                % (c, w_pad.shape[0]))

        tm = _choose_row_tile(n)
        co_pad = w_pad.shape[1]
        tn = 256 if (co_pad % 256 == 0 and co_pad >= 256) else 128

        return _run_dynamic_linear(
            inputs, w_pad, b_row, tm=tm, tn=tn,
            out_cols=self.runtime_outc, compute_dtype=self.compute_dtype)


# --------------------------------- test ---------------------------------------


if __name__ == "__main__":
    key = jax.random.PRNGKey(0)
    k_param, k_x, k_x2, k_x3, k_p3 = jax.random.split(key, 5)

    # --- test 1: plain slice path (bias) ------------------------------------
    INC, OUTC = 32, 32
    RUNTIME_OUTC = 16
    N, C_RUNTIME = 64, 24
    layer = DynamicLinear(INC, OUTC, bias=True, key=k_param)
    layer.set_output_channel(RUNTIME_OUTC)
    x = jax.random.normal(k_x, (N, C_RUNTIME), dtype=jnp.float32)
    out = jax.block_until_ready(layer(x))
    ref = x @ layer.weight[:RUNTIME_OUTC, :C_RUNTIME].T + layer.bias_param[:RUNTIME_OUTC]
    assert out.shape == (N, RUNTIME_OUTC)
    assert jnp.allclose(out, ref, atol=1e-4, rtol=1e-4)

    # second forward hits the cached (sliced / lane-padded) weight
    out_again = jax.block_until_ready(layer(x))
    assert jnp.allclose(out_again, ref, atol=1e-4, rtol=1e-4)

    # --- test 2: constraint (gather) path ------------------------------------
    constraint = [0, 2, 4, 6, 8, 10, 12, 14, 1, 3, 5, 7, 9, 11, 13, 15]
    layer2 = DynamicLinear(INC, OUTC, bias=True, key=k_param)
    layer2.set_in_channel(constraint=constraint)
    layer2.set_output_channel(RUNTIME_OUTC)
    x2 = jax.random.normal(k_x2, (N, len(constraint)), dtype=jnp.float32)
    out2 = jax.block_until_ready(layer2(x2))
    ref2 = (x2 @ layer2.weight[:RUNTIME_OUTC, :][:, jnp.asarray(constraint)].T
            + layer2.bias_param[:RUNTIME_OUTC])
    assert jnp.allclose(out2, ref2, atol=1e-4, rtol=1e-4)

    # --- test 3: no-bias, non-multiple-of-8 rows, >128 output channels -------
    INC3, OUTC3 = 96, 320
    layer3 = DynamicLinear(INC3, OUTC3, bias=False, key=k_p3)
    layer3.set_output_channel(OUTC3)
    x3 = jax.random.normal(k_x3, (300, 80), dtype=jnp.float32)
    out3 = jax.block_until_ready(layer3(x3))
    ref3 = x3 @ layer3.weight[:OUTC3, :80].T
    assert out3.shape == (300, OUTC3)
    assert jnp.allclose(out3, ref3, atol=1e-4, rtol=1e-4)

    print("KERNEL_OK")
</pallas_src>

<mosaic_0001>
module attributes {stable_mosaic.version = 11 : i64} {
  func.func @_dl_kernel_bias(%arg0: i32, %arg1: i32, %arg2: memref<32x24xf32, #tpu.memory_space<vmem>>, %arg3: memref<24x128xf32, #tpu.memory_space<vmem>>, %arg4: memref<1x128xf32, #tpu.memory_space<vmem>>, %arg5: memref<32x128xf32, #tpu.memory_space<vmem>>) attributes {dimension_semantics = [#tpu.dimension_semantics<parallel>, #tpu.dimension_semantics<parallel>], iteration_bounds = array<i64: 2, 1>, scalar_prefetch = 0 : i64, scratch_operands = 0 : i64, tpu.core_type = #tpu.core_type<tc>, window_params = [{transform_indices = @transform_0, window_bounds = array<i64: 32, 24>}, {pipeline_mode = #tpu.pipeline_mode<synchronous>, transform_indices = @transform_1, window_bounds = array<i64: 24, 128>}, {pipeline_mode = #tpu.pipeline_mode<synchronous>, transform_indices = @transform_2, window_bounds = array<i64: 1, 128>}, {transform_indices = @transform_3, window_bounds = array<i64: 32, 128>}]} {
    %c0 = arith.constant 0 : index
    %c0_0 = arith.constant 0 : index
    %0 = vector.load %arg2[%c0, %c0_0] : memref<32x24xf32, #tpu.memory_space<vmem>>, vector<32x24xf32>
    %c0_1 = arith.constant 0 : index
    %c0_2 = arith.constant 0 : index
    %1 = vector.load %arg3[%c0_1, %c0_2] : memref<24x128xf32, #tpu.memory_space<vmem>>, vector<24x128xf32>
    %cst = arith.constant dense<0.000000e+00> : vector<32x128xf32>
    %2 = tpu.matmul %0, %1, %cst {dimension_numbers = #tpu.dot_dimension_numbers<[1], [0], [0], [1], [0, 0, 1, 1], [], []>} : vector<32x24xf32>, vector<24x128xf32>, vector<32x128xf32> -> vector<32x128xf32>
    %c0_3 = arith.constant 0 : index
    %c0_4 = arith.constant 0 : index
    %3 = vector.load %arg4[%c0_3, %c0_4] : memref<1x128xf32, #tpu.memory_space<vmem>>, vector<1x128xf32>
    %4 = vector.broadcast %3 : vector<1x128xf32> to vector<32x128xf32>
    %5 = arith.addf %2, %4 : vector<32x128xf32>
    %c0_5 = arith.constant 0 : index
    %c0_6 = arith.constant 0 : index
    %6 = vector.load %arg5[%c0_5, %c0_6] : memref<32x128xf32, #tpu.memory_space<vmem>>, vector<32x128xf32>
    tpu.vector_store %arg5[%c0_5, %c0_6], %5 {strides = array<i32>} : memref<32x128xf32, #tpu.memory_space<vmem>>, vector<32x128xf32>,
    return
  }
  func.func @transform_0(%arg0: i32, %arg1: i32) -> (i32, i32) {
    %c0_i32 = arith.constant 0 : i32
    %c0_i32_0 = arith.constant 0 : i32
    return %arg0, %c0_i32 : i32, i32
  }
  func.func @transform_1(%arg0: i32, %arg1: i32) -> (i32, i32) {
    %c0_i32 = arith.constant 0 : i32
    %c0_i32_0 = arith.constant 0 : i32
    return %c0_i32, %arg1 : i32, i32
  }
  func.func @transform_2(%arg0: i32, %arg1: i32) -> (i32, i32) {
    %c0_i32 = arith.constant 0 : i32
    %c0_i32_0 = arith.constant 0 : i32
    return %c0_i32, %arg1 : i32, i32
  }
  func.func @transform_3(%arg0: i32, %arg1: i32) -> (i32, i32) {
    %c0_i32 = arith.constant 0 : i32
    return %arg0, %arg1 : i32, i32
  }
}

module attributes {stable_mosaic.version = 11 : i64} {
  func.func @_dl_kernel_bias(%arg0: i32, %arg1: i32, %arg2: memref<32x24xf32, #tpu.memory_space<vmem>>, %arg3: memref<24x128xf32, #tpu.memory_space<vmem>>, %arg4: memref<1x128xf32, #tpu.memory_space<vmem>>, %arg5: memref<32x128xf32, #tpu.memory_space<vmem>>) attributes {dimension_semantics = [#tpu.dimension_semantics<parallel>, #tpu.dimension_semantics<parallel>], iteration_bounds = array<i64: 2, 1>, scalar_prefetch = 0 : i64, scratch_operands = 0 : i64, tpu.core_type = #tpu.core_type<tc>, window_params = [{transform_indices = @transform_0, window_bounds = array<i64: 32, 24>}, {transform_indices = @transform_1, window_bounds = array<i64: 24, 128>}, {transform_indices = @transform_2, window_bounds = array<i64: 1, 128>}, {transform_indices = @transform_3, window_bounds = array<i64: 32, 128>}]} {
    %c0 = arith.constant 0 : index
    %c0_0 = arith.constant 0 : index
    %0 = vector.load %arg2[%c0, %c0_0] : memref<32x24xf32, #tpu.memory_space<vmem>>, vector<32x24xf32>
    %c0_1 = arith.constant 0 : index
    %c0_2 = arith.constant 0 : index
    %1 = vector.load %arg3[%c0_1, %c0_2] : memref<24x128xf32, #tpu.memory_space<vmem>>, vector<24x128xf32>
    %cst = arith.constant dense<0.000000e+00> : vector<32x128xf32>
    %2 = tpu.matmul %0, %1, %cst {dimension_numbers = #tpu.dot_dimension_numbers<[1], [0], [0], [1], [0, 0, 1, 1], [], []>} : vector<32x24xf32>, vector<24x128xf32>, vector<32x128xf32> -> vector<32x128xf32>
    %c0_3 = arith.constant 0 : index
    %c0_4 = arith.constant 0 : index
    %3 = vector.load %arg4[%c0_3, %c0_4] : memref<1x128xf32, #tpu.memory_space<vmem>>, vector<1x128xf32>
    %4 = vector.broadcast %3 : vector<1x128xf32> to vector<32x128xf32>
    %5 = arith.addf %2, %4 : vector<32x128xf32>
    %c0_5 = arith.constant 0 : index
    %c0_6 = arith.constant 0 : index
    %6 = vector.load %arg5[%c0_5, %c0_6] : memref<32x128xf32, #tpu.memory_space<vmem>>, vector<32x128xf32>
    tpu.vector_store %arg5[%c0_5, %c0_6], %5 {strides = array<i32>} : memref<32x128xf32, #tpu.memory_space<vmem>>, vector<32x128xf32>,
    return
  }
  func.func @transform_0(%arg0: i32, %arg1: i32) -> (i32, i32) {
    %c0_i32 = arith.constant 0 : i32
    %c0_i32_0 = arith.constant 0 : i32
    return %arg0, %c0_i32 : i32, i32
  }
  func.func @transform_1(%arg0: i32, %arg1: i32) -> (i32, i32) {
    %c0_i32 = arith.constant 0 : i32
    %c0_i32_0 = arith.constant 0 : i32
    return %c0_i32, %arg1 : i32, i32
  }
  func.func @transform_2(%arg0: i32, %arg1: i32) -> (i32, i32) {
    %c0_i32 = arith.constant 0 : i32
    %c0_i32_0 = arith.constant 0 : i32
    return %c0_i32, %arg1 : i32, i32
  }
  func.func @transform_3(%arg0: i32, %arg1: i32) -> (i32, i32) {
    %c0_i32 = arith.constant 0 : i32
    return %arg0, %arg1 : i32, i32
  }
}

</mosaic_0001>

<llo_original>
// kernel: _dynamic_linear_pallas.1
$region0: #{_dynamic_linear_pallas.1}
  #allocation0 [shape = 'u32[]', space=smem, size = 0x4, offset = 0x4, fixed_abs, tag = 'smem constant byte address 0x4 - core index']
  #allocation1 [shape = 'u32[72,128]{1,0:T(1,128)}', space=vmem, size = 0x9000, scoped, tag = 'internal scratch']
  %s0 = inlined_call_operand.vmem [shape: f32[64,24], index: 0, kind: input, shape index: {}]
  %s1 = inlined_call_operand.vmem [shape: f32[24,128], index: 1, kind: input, shape index: {}]
  %s2 = inlined_call_operand.vmem [shape: f32[1,128], index: 2, kind: input, shape index: {}]
  %s3 = inlined_call_operand.vmem [shape: f32[64,128], index: 3, kind: output, shape index: {}]
  %s4 = sld [smem:[#allocation0]]
  $region45: #{_dynamic_linear_pallas.1} parent=0
    _
  %s6 = ssub.s32 1, %s4
  %s7 = scalar_select 0, %s6, %s4
  loop: start=0, step=1, limit=4
  $region2: #{_dynamic_linear_pallas.1} parent=0 // loop_pre_header
    _
  $region3: #{_dynamic_linear_pallas.1} parent=0 // loop_header
    %s9 = sphi 0, %s13
    %p10 = scmp.ge.s32.totalorder %s9, 4
    %s16 = sphi 0, %s28
    %s17 = sphi 0, %s24
    %s18 = sphi 0, %s16
    %s19 = sphi 0, %s17
    %s20 = sphi 0, %s18
    %s21 = sphi 0, %s19
    %s31 = sphi 0, %s33
    %s34 = sphi 0, %s31
    %s35 = sphi 0, %s34
    %s51 = sphi 0, %s35
    %s57 = sphi 0, %s59
    %s60 = sphi 0, %s57
    %s61 = sphi 0, %s60
    %s77 = sphi 0, %s61
    %s83 = sphi 0, %s85
    %s86 = sphi 0, %s83
    %s87 = sphi 0, %s86
    %s103 = sphi 0, %s87
    %s111 = sphi 0, %s113
    %s114 = sphi 0, %s111
    %s115 = sphi 0, %s114
    %s131 = sphi 0, %s115
  $region4: #{_dynamic_linear_pallas.1} parent=0 // loop_header_branch
    %12 = sbr.rel (%p10) target = $region8
  $region5: #{_dynamic_linear_pallas.1} parent=0 // loop_body
    %s14 = ssub.s32 %s9, 1
    %s15 = ssub.s32 %s9, 2
    %s22 = sadd.s32 1, %s17
    %p23 = scmp.ge.s32.totalorder %s22, 1
    %s24 = scalar_select %p23, 0, %s22
    %s25 = sadd.s32 1, %s16
    %s26 = scalar_select %p23, %s25, %s16
    %p27 = scmp.ge.s32.totalorder %s26, 2
    %s28 = scalar_select %p27, 0, %s26
    %s29 = ssub.s32 %s16, %s28
    %p30 = scmp.eq.s32.totalorder %s29, 0
    %s32 = sadd.s32 %s31, 1
    %s33 = scalar_select %p30, %s31, %s32
    %p36 = pneg %p30
    %p37 = scmp.eq.s32.totalorder %s9, 1
    %p38 = por %p36, %p37
    %p39 = scmp.ne.s32.totalorder %s31, %s34
    %p40 = scmp.eq.s32.totalorder %s9, 0
    %p41 = por %p39, %p40
    %p42 = scmp.ne.s32.totalorder %s31, %s34
    %p43 = scmp.eq.s32.totalorder %s14, 1
    %p44 = por %p42, %p43
    %p45 = scmp.ne.s32.totalorder %s34, %s35
    %p46 = scmp.eq.s32.totalorder %s14, 0
    %p47 = por %p45, %p46
    %p48 = scmp.ne.s32.totalorder %s34, %s35
    %p49 = scmp.eq.s32.totalorder %s15, 1
    %p50 = por %p48, %p49
    %p52 = scmp.ne.s32.totalorder %s35, %s51
    %p53 = scmp.eq.s32.totalorder %s15, 0
    %p54 = por %p52, %p53
    %s55 = ssub.s32 %s17, %s24
    %p56 = scmp.eq.s32.totalorder %s55, 0
    %s58 = sadd.s32 %s57, 1
    %s59 = scalar_select %p56, %s57, %s58
    %p62 = pneg %p56
    %p63 = scmp.eq.s32.totalorder %s9, 1
    %p64 = por %p62, %p63
    %p65 = scmp.ne.s32.totalorder %s57, %s60
    %p66 = scmp.eq.s32.totalorder %s9, 0
    %p67 = por %p65, %p66
    %p68 = scmp.ne.s32.totalorder %s57, %s60
    %p69 = scmp.eq.s32.totalorder %s14, 1
    %p70 = por %p68, %p69
    %p71 = scmp.ne.s32.totalorder %s60, %s61
    %p72 = scmp.eq.s32.totalorder %s14, 0
    %p73 = por %p71, %p72
    %p74 = scmp.ne.s32.totalorder %s60, %s61
    %p75 = scmp.eq.s32.totalorder %s15, 1
    %p76 = por %p74, %p75
    %p78 = scmp.ne.s32.totalorder %s61, %s77
    %p79 = scmp.eq.s32.totalorder %s15, 0
    %p80 = por %p78, %p79
    %s81 = ssub.s32 %s17, %s24
    %p82 = scmp.eq.s32.totalorder %s81, 0
    %s84 = sadd.s32 %s83, 1
    %s85 = scalar_select %p82, %s83, %s84
    %p88 = pneg %p82
    %p89 = scmp.eq.s32.totalorder %s9, 1
    %p90 = por %p88, %p89
    %p91 = scmp.ne.s32.totalorder %s83, %s86
    %p92 = scmp.eq.s32.totalorder %s9, 0
    %p93 = por %p91, %p92
    %p94 = scmp.ne.s32.totalorder %s83, %s86
    %p95 = scmp.eq.s32.totalorder %s14, 1
    %p96 = por %p94, %p95
    %p97 = scmp.ne.s32.totalorder %s86, %s87
    %p98 = scmp.eq.s32.totalorder %s14, 0
    %p99 = por %p97, %p98
    %p100 = scmp.ne.s32.totalorder %s86, %s87
    %p101 = scmp.eq.s32.totalorder %s15, 1
    %p102 = por %p100, %p101
    %p104 = scmp.ne.s32.totalorder %s87, %s103
    %p105 = scmp.eq.s32.totalorder %s15, 0
    %p106 = por %p104, %p105
    %s107 = ssub.s32 %s16, %s28
    %s108 = ssub.s32 %s17, %s24
    %s109 = sor.u32 %s107, %s108
    %p110 = scmp.eq.s32.totalorder %s109, 0
    %s112 = sadd.s32 %s111, 1
    %s113 = scalar_select %p110, %s111, %s112
    %p116 = pneg %p110
    %p117 = scmp.eq.s32.totalorder %s9, 1
    %p118 = por %p116, %p117
    %p119 = scmp.ne.s32.totalorder %s111, %s114
    %p120 = scmp.eq.s32.totalorder %s9, 0
    %p121 = por %p119, %p120
    %p122 = scmp.ne.s32.totalorder %s111, %s114
    %p123 = scmp.eq.s32.totalorder %s14, 1
    %p124 = por %p122, %p123
    %p125 = scmp.ne.s32.totalorder %s114, %s115
    %p126 = scmp.eq.s32.totalorder %s14, 0
    %p127 = por %p125, %p126
    %p128 = scmp.ne.s32.totalorder %s114, %s115
    %p129 = scmp.eq.s32.totalorder %s15, 1
    %p130 = por %p128, %p129
    %p132 = scmp.ne.s32.totalorder %s115, %s131
    %p133 = scmp.eq.s32.totalorder %s15, 0
    %p134 = por %p132, %p133
    %p135 = scmp.le.s32.totalorder 1, %s9
    %p136 = scmp.lt.s32.totalorder %s9, 3
    %p137 = pnand %p135, %p136
    %p138 = pneg %p137
    // Predicated region
    $region9: #{_dynamic_linear_pallas.1} parent=5 // pred_check
      _
    $region10: #{_dynamic_linear_pallas.1} parent=5 // pred_check_branch
      %140 = sbr.rel (%p137) target = $region12
    $region11: #{_dynamic_linear_pallas.1} parent=5 // pred_region
      %s141 = ssub.s32 %s9, 1
      // Predicated region
      $region13: #{_dynamic_linear_pallas.1} parent=11 // pred_check
        %p142 = pneg %p73
      $region14: #{_dynamic_linear_pallas.1} parent=11 // pred_check_branch
        %144 = sbr.rel (%p142) target = $region16
      $region15: #{_dynamic_linear_pallas.1} parent=11 // pred_region
        %p145 = scmp.lt.s32.totalorder %s19, 0
        %s146 = scalar_select %p145, %s19, 0
        %s147 = smul.addr %s146, 8
        %s148 = scalar_lea.vmem %s1, %s147
      $region16: #{_dynamic_linear_pallas.1} parent=11 // pred_fallthru
        _
      // Predicated region
      $region17: #{_dynamic_linear_pallas.1} parent=11 // pred_check
        %p149 = pneg %p99
      $region18: #{_dynamic_linear_pallas.1} parent=11 // pred_check_branch
        %151 = sbr.rel (%p149) target = $region20
      $region19: #{_dynamic_linear_pallas.1} parent=11 // pred_region
        %p152 = scmp.lt.s32.totalorder %s19, 0
        %s153 = scalar_select %p152, %s19, 0
        %s154 = scalar_lea.vmem %s2, %s153
      $region20: #{_dynamic_linear_pallas.1} parent=11 // pred_fallthru
        _
    $region12: #{_dynamic_linear_pallas.1} parent=5 // pred_fallthru
      _
    %p155 = scmp.lt.s32.totalorder %s9, 2
    // Predicated region
    $region21: #{_dynamic_linear_pallas.1} parent=5 // pred_check
      %p156 = pneg %p155
    $region22: #{_dynamic_linear_pallas.1} parent=5 // pred_check_branch
      %158 = sbr.rel (%p156) target = $region24
    $region23: #{_dynamic_linear_pallas.1} parent=5 // pred_region
      // Predicated region
      $region25: #{_dynamic_linear_pallas.1} parent=23 // pred_check
        %p159 = pneg %p41
      $region26: #{_dynamic_linear_pallas.1} parent=23 // pred_check_branch
        %161 = sbr.rel (%p159) target = $region28
      $region27: #{_dynamic_linear_pallas.1} parent=23 // pred_region
        %s162 = smul.u32 4, %s16
        %p163 = scmp.lt.s32.totalorder %s162, 7
        %s164 = scalar_select %p163, %s162, 7
        %s165 = smul.addr %s164, 8
        %s166 = scalar_lea.vmem %s0, %s165
        %s167 = smul.u32 4, %s16
      $region28: #{_dynamic_linear_pallas.1} parent=23 // pred_fallthru
        _
    $region24: #{_dynamic_linear_pallas.1} parent=5 // pred_fallthru
      _
    %p168 = scmp.le.s32.totalorder 1, %s9
    %p169 = scmp.lt.s32.totalorder %s9, 3
    %p170 = pnand %p168, %p169
    %p171 = pneg %p170
    // Predicated region
    $region29: #{_dynamic_linear_pallas.1} parent=5 // pred_check
      _
    $region30: #{_dynamic_linear_pallas.1} parent=5 // pred_check_branch
      %173 = sbr.rel (%p170) target = $region32
    $region31: #{_dynamic_linear_pallas.1} parent=5 // pred_region
      %s174 = ssub.s32 %s9, 1
      %s175 = smul.u32 4, %s18
      %p176 = scmp.lt.s32.totalorder %s175, 7
      %s177 = scalar_select %p176, %s175, 7
      %s178 = smul.addr %s177, 8
      %s179 = scalar_lea.vmem %s0, %s178
      %p180 = pneg %p47
      %p181 = pneg %p44
      %p182 = scmp.lt.s32.totalorder %s19, 0
      %s183 = scalar_select %p182, %s19, 0
      %s184 = smul.addr %s183, 8
      %s185 = scalar_lea.vmem %s1, %s184
      %p186 = pneg %p73
      %p187 = pneg %p70
      %p188 = scmp.lt.s32.totalorder %s19, 0
      %s189 = scalar_select %p188, %s19, 0
      %s190 = scalar_lea.vmem %s2, %s189
      %p191 = pneg %p99
      %p192 = pneg %p96
      %p193 = pneg %p127
      %p194 = pneg %p124
      %s195 = smul.u32 4, %s18
      %p196 = scmp.lt.s32.totalorder %s195, 7
      %s197 = scalar_select %p196, %s195, 7
      %p198 = scmp.lt.s32.totalorder %s19, 0
      %s199 = scalar_select %p198, %s19, 0
      %s200 = sadd.s32 %s199, %s197
      %s201 = smul.addr %s200, 8
      %s202 = scalar_lea.vmem %s3, %s201
      %s203 = smul.u32 4, %s18
      %p204 = scmp.lt.s32.totalorder %s203, 7
      %s205 = scalar_select %p204, %s203, 7
      %s206 = smul.addr %s205, 8
      %s207 = scalar_lea.vmem %s0, %s206
      %s208 = smul.u32 4, %s18
      %p209 = scmp.lt.s32.totalorder %s19, 0
      %s210 = scalar_select %p209, %s19, 0
      %s211 = smul.addr %s210, 8
      %s212 = scalar_lea.vmem %s1, %s211
      %p213 = scmp.lt.s32.totalorder %s19, 0
      %s214 = scalar_select %p213, %s19, 0
      %s215 = scalar_lea.vmem %s2, %s214
      %s216 = smul.u32 4, %s18
      %p217 = scmp.lt.s32.totalorder %s216, 7
      %s218 = scalar_select %p217, %s216, 7
      %p219 = scmp.lt.s32.totalorder %s19, 0
      %s220 = scalar_select %p219, %s19, 0
      %s221 = sadd.s32 %s220, %s218
      %s222 = smul.addr %s221, 8
      %s223 = scalar_lea.vmem %s3, %s222
      %s224 = smul.u32 4, %s18
      %v225 = vld [vmem:[%s207] sm:$0xff]
      %v226 = vld [vmem:[%s207 + $0x8] sm:$0xff]
      %v227 = vld [vmem:[%s207 + $0x10] sm:$0xff]
      %v228 = vld [vmem:[%s207 + $0x18] sm:$0xff]
      %v229 = vld [vmem:[%s212] sm:$0xff]
      %v230 = vld [vmem:[%s212 + $0x8] sm:$0xff]
      %v231 = vld [vmem:[%s212 + $0x10] sm:$0xff]
      %v232 = vld [vmem:[%s215] sm:$0x1]
      %v234 = vperm.slane %v232, 0
      %vm236 = vcmask 195584
      %v238 = vsel %vm236, %v225, 0
      %v241 = vsel %vm236, %v226, 0
      %v244 = vsel %vm236, %v227, 0
      %v247 = vsel %vm236, %v228, 0
      %249 = vmatpush.msra.mxu0 0.0
      %250 = vmatpush.msra.mxu0 0.0
      %251 = vmatpush.msra.mxu0 0.0
      %252 = vmatpush.msra.mxu0 0.0
      %253 = vmatpush.msra.mxu0 0.0
      %254 = vmatpush.msra.mxu0 0.0
      %255 = vmatpush.msra.mxu0 0.0
      %256 = vmatpush.msra.mxu0 0.0
      %257 = vmatpush.msra.mxu0 0.0
      %258 = vmatpush.msra.mxu0 0.0
      %259 = vmatpush.msra.mxu0 0.0
      %260 = vmatpush.msra.mxu0 0.0
      %261 = vmatpush.msra.mxu0 0.0
      %262 = vmatpush.msra.mxu0 %v231
      %263 = vmatpush.msra.mxu0 %v230
      %264 = vmatpush.msra.mxu0 %v229
      %265 = vmatmul.f32.gmra.mxu0 %v238
      %v266 = vpop.f32.mrf.mxu0
      %v267 = vadd.f32 %v234, %v266
      %268 = vmatmul.f32.gmra.mxu0 %v241
      %v269 = vpop.f32.mrf.mxu0
      %v270 = vadd.f32 %v234, %v269
      %271 = vmatmul.f32.gmra.mxu0 %v244
      %v272 = vpop.f32.mrf.mxu0
      %v273 = vadd.f32 %v234, %v272
      %274 = vmatmul.f32.gmra.mxu0 %v247
      %v275 = vpop.f32.mrf.mxu0
      %v276 = vadd.f32 %v234, %v275
      %277 = vdwg.mxu0
      %278 = vst [vmem:[%s223] sm:$0xff] %v267
      %279 = vst [vmem:[%s223 + $0x8] sm:$0xff] %v270
      %280 = vst [vmem:[%s223 + $0x10] sm:$0xff] %v273
      %281 = vst [vmem:[%s223 + $0x18] sm:$0xff] %v276
      %s282 = smul.u32 4, %s18
      %p283 = scmp.lt.s32.totalorder %s282, 7
      %s284 = scalar_select %p283, %s282, 7
      %p285 = scmp.lt.s32.totalorder %s19, 0
      %s286 = scalar_select %p285, %s19, 0
      %s287 = sadd.s32 %s286, %s284
      %s288 = smul.addr %s287, 8
      %s289 = scalar_lea.vmem %s3, %s288
      // Predicated region
      $region33: #{_dynamic_linear_pallas.1} parent=31 // pred_check
        %p290 = pneg %p124
      $region34: #{_dynamic_linear_pallas.1} parent=31 // pred_check_branch
        %292 = sbr.rel (%p290) target = $region36
      $region35: #{_dynamic_linear_pallas.1} parent=31 // pred_region
        %s293 = smul.u32 4, %s18
      $region36: #{_dynamic_linear_pallas.1} parent=31 // pred_fallthru
        _
    $region32: #{_dynamic_linear_pallas.1} parent=5 // pred_fallthru
      _
    %p294 = scmp.le.s32.totalorder 2, %s9
    // Predicated region
    $region37: #{_dynamic_linear_pallas.1} parent=5 // pred_check
      %p295 = pneg %p294
    $region38: #{_dynamic_linear_pallas.1} parent=5 // pred_check_branch
      %297 = sbr.rel (%p295) target = $region40
    $region39: #{_dynamic_linear_pallas.1} parent=5 // pred_region
      %s298 = ssub.s32 %s9, 2
      // Predicated region
      $region41: #{_dynamic_linear_pallas.1} parent=39 // pred_check
        %p299 = pneg %p130
      $region42: #{_dynamic_linear_pallas.1} parent=39 // pred_check_branch
        %301 = sbr.rel (%p299) target = $region44
      $region43: #{_dynamic_linear_pallas.1} parent=39 // pred_region
        %s302 = smul.u32 4, %s20
        %p303 = scmp.lt.s32.totalorder %s302, 7
        %s304 = scalar_select %p303, %s302, 7
        %p305 = scmp.lt.s32.totalorder %s21, 0
        %s306 = scalar_select %p305, %s21, 0
        %s307 = sadd.s32 %s306, %s304
        %s308 = smul.addr %s307, 8
        %s309 = scalar_lea.vmem %s3, %s308
      $region44: #{_dynamic_linear_pallas.1} parent=39 // pred_fallthru
        _
    $region40: #{_dynamic_linear_pallas.1} parent=5 // pred_fallthru
      _
  $region6: #{_dynamic_linear_pallas.1} parent=0 // loop_footer
    %s13 = sadd.s32 1, %s9
  $region7: #{_dynamic_linear_pallas.1} parent=0 // loop_footer_branch
    %8 = sbr.rel target = $region3
  $region8: #{_dynamic_linear_pallas.1} parent=0 // loop_exit
    _

// kernel: _dynamic_linear_pallas.1
$region0: #{_dynamic_linear_pallas.1}
  #allocation0 [shape = 'u32[]', space=smem, size = 0x4, offset = 0x4, fixed_abs, tag = 'smem constant byte address 0x4 - core index']
  #allocation1 [shape = 'u32[72,128]{1,0:T(1,128)}', space=vmem, size = 0x9000, scoped, tag = 'internal scratch']
  %s0 = inlined_call_operand.vmem [shape: f32[64,24], index: 0, kind: input, shape index: {}]
  %s1 = inlined_call_operand.vmem [shape: f32[24,128], index: 1, kind: input, shape index: {}]
  %s2 = inlined_call_operand.vmem [shape: f32[1,128], index: 2, kind: input, shape index: {}]
  %s3 = inlined_call_operand.vmem [shape: f32[64,128], index: 3, kind: output, shape index: {}]
  %s4 = sld [smem:[#allocation0]]
  $region45: #{_dynamic_linear_pallas.1} parent=0
    _
  %s6 = ssub.s32 1, %s4
  %s7 = scalar_select 0, %s6, %s4
  loop: start=0, step=1, limit=4
  $region2: #{_dynamic_linear_pallas.1} parent=0 // loop_pre_header
    _
  $region3: #{_dynamic_linear_pallas.1} parent=0 // loop_header
    %s9 = sphi 0, %s13
    %p10 = scmp.ge.s32.totalorder %s9, 4
    %s16 = sphi 0, %s28
    %s17 = sphi 0, %s24
    %s18 = sphi 0, %s16
    %s19 = sphi 0, %s17
    %s20 = sphi 0, %s18
    %s21 = sphi 0, %s19
    %s31 = sphi 0, %s33
    %s34 = sphi 0, %s31
    %s35 = sphi 0, %s34
    %s51 = sphi 0, %s35
    %s57 = sphi 0, %s59
    %s60 = sphi 0, %s57
    %s61 = sphi 0, %s60
    %s77 = sphi 0, %s61
    %s83 = sphi 0, %s85
    %s86 = sphi 0, %s83
    %s87 = sphi 0, %s86
    %s103 = sphi 0, %s87
    %s111 = sphi 0, %s113
    %s114 = sphi 0, %s111
    %s115 = sphi 0, %s114
    %s131 = sphi 0, %s115
  $region4: #{_dynamic_linear_pallas.1} parent=0 // loop_header_branch
    %12 = sbr.rel (%p10) target = $region8
  $region5: #{_dynamic_linear_pallas.1} parent=0 // loop_body
    %s14 = ssub.s32 %s9, 1
    %s15 = ssub.s32 %s9, 2
    %s22 = sadd.s32 1, %s17
    %p23 = scmp.ge.s32.totalorder %s22, 1
    %s24 = scalar_select %p23, 0, %s22
    %s25 = sadd.s32 1, %s16
    %s26 = scalar_select %p23, %s25, %s16
    %p27 = scmp.ge.s32.totalorder %s26, 2
    %s28 = scalar_select %p27, 0, %s26
    %s29 = ssub.s32 %s16, %s28
    %p30 = scmp.eq.s32.totalorder %s29, 0
    %s32 = sadd.s32 %s31, 1
    %s33 = scalar_select %p30, %s31, %s32
    %p36 = pneg %p30
    %p37 = scmp.eq.s32.totalorder %s9, 1
    %p38 = por %p36, %p37
    %p39 = scmp.ne.s32.totalorder %s31, %s34
    %p40 = scmp.eq.s32.totalorder %s9, 0
    %p41 = por %p39, %p40
    %p42 = scmp.ne.s32.totalorder %s31, %s34
    %p43 = scmp.eq.s32.totalorder %s14, 1
    %p44 = por %p42, %p43
    %p45 = scmp.ne.s32.totalorder %s34, %s35
    %p46 = scmp.eq.s32.totalorder %s14, 0
    %p47 = por %p45, %p46
    %p48 = scmp.ne.s32.totalorder %s34, %s35
    %p49 = scmp.eq.s32.totalorder %s15, 1
    %p50 = por %p48, %p49
    %p52 = scmp.ne.s32.totalorder %s35, %s51
    %p53 = scmp.eq.s32.totalorder %s15, 0
    %p54 = por %p52, %p53
    %s55 = ssub.s32 %s17, %s24
    %p56 = scmp.eq.s32.totalorder %s55, 0
    %s58 = sadd.s32 %s57, 1
    %s59 = scalar_select %p56, %s57, %s58
    %p62 = pneg %p56
    %p63 = scmp.eq.s32.totalorder %s9, 1
    %p64 = por %p62, %p63
    %p65 = scmp.ne.s32.totalorder %s57, %s60
    %p66 = scmp.eq.s32.totalorder %s9, 0
    %p67 = por %p65, %p66
    %p68 = scmp.ne.s32.totalorder %s57, %s60
    %p69 = scmp.eq.s32.totalorder %s14, 1
    %p70 = por %p68, %p69
    %p71 = scmp.ne.s32.totalorder %s60, %s61
    %p72 = scmp.eq.s32.totalorder %s14, 0
    %p73 = por %p71, %p72
    %p74 = scmp.ne.s32.totalorder %s60, %s61
    %p75 = scmp.eq.s32.totalorder %s15, 1
    %p76 = por %p74, %p75
    %p78 = scmp.ne.s32.totalorder %s61, %s77
    %p79 = scmp.eq.s32.totalorder %s15, 0
    %p80 = por %p78, %p79
    %s81 = ssub.s32 %s17, %s24
    %p82 = scmp.eq.s32.totalorder %s81, 0
    %s84 = sadd.s32 %s83, 1
    %s85 = scalar_select %p82, %s83, %s84
    %p88 = pneg %p82
    %p89 = scmp.eq.s32.totalorder %s9, 1
    %p90 = por %p88, %p89
    %p91 = scmp.ne.s32.totalorder %s83, %s86
    %p92 = scmp.eq.s32.totalorder %s9, 0
    %p93 = por %p91, %p92
    %p94 = scmp.ne.s32.totalorder %s83, %s86
    %p95 = scmp.eq.s32.totalorder %s14, 1
    %p96 = por %p94, %p95
    %p97 = scmp.ne.s32.totalorder %s86, %s87
    %p98 = scmp.eq.s32.totalorder %s14, 0
    %p99 = por %p97, %p98
    %p100 = scmp.ne.s32.totalorder %s86, %s87
    %p101 = scmp.eq.s32.totalorder %s15, 1
    %p102 = por %p100, %p101
    %p104 = scmp.ne.s32.totalorder %s87, %s103
    %p105 = scmp.eq.s32.totalorder %s15, 0
    %p106 = por %p104, %p105
    %s107 = ssub.s32 %s16, %s28
    %s108 = ssub.s32 %s17, %s24
    %s109 = sor.u32 %s107, %s108
    %p110 = scmp.eq.s32.totalorder %s109, 0
    %s112 = sadd.s32 %s111, 1
    %s113 = scalar_select %p110, %s111, %s112
    %p116 = pneg %p110
    %p117 = scmp.eq.s32.totalorder %s9, 1
    %p118 = por %p116, %p117
    %p119 = scmp.ne.s32.totalorder %s111, %s114
    %p120 = scmp.eq.s32.totalorder %s9, 0
    %p121 = por %p119, %p120
    %p122 = scmp.ne.s32.totalorder %s111, %s114
    %p123 = scmp.eq.s32.totalorder %s14, 1
    %p124 = por %p122, %p123
    %p125 = scmp.ne.s32.totalorder %s114, %s115
    %p126 = scmp.eq.s32.totalorder %s14, 0
    %p127 = por %p125, %p126
    %p128 = scmp.ne.s32.totalorder %s114, %s115
    %p129 = scmp.eq.s32.totalorder %s15, 1
    %p130 = por %p128, %p129
    %p132 = scmp.ne.s32.totalorder %s115, %s131
    %p133 = scmp.eq.s32.totalorder %s15, 0
    %p134 = por %p132, %p133
    %p135 = scmp.le.s32.totalorder 1, %s9
    %p136 = scmp.lt.s32.totalorder %s9, 3
    %p137 = pnand %p135, %p136
    %p138 = pneg %p137
    // Predicated region
    $region9: #{_dynamic_linear_pallas.1} parent=5 // pred_check
      _
    $region10: #{_dynamic_linear_pallas.1} parent=5 // pred_check_branch
      %140 = sbr.rel (%p137) target = $region12
    $region11: #{_dynamic_linear_pallas.1} parent=5 // pred_region
      %s141 = ssub.s32 %s9, 1
      // Predicated region
      $region13: #{_dynamic_linear_pallas.1} parent=11 // pred_check
        %p142 = pneg %p73
      $region14: #{_dynamic_linear_pallas.1} parent=11 // pred_check_branch
        %144 = sbr.rel (%p142) target = $region16
      $region15: #{_dynamic_linear_pallas.1} parent=11 // pred_region
        %p145 = scmp.lt.s32.totalorder %s19, 0
        %s146 = scalar_select %p145, %s19, 0
        %s147 = smul.addr %s146, 8
        %s148 = scalar_lea.vmem %s1, %s147
      $region16: #{_dynamic_linear_pallas.1} parent=11 // pred_fallthru
        _
      // Predicated region
      $region17: #{_dynamic_linear_pallas.1} parent=11 // pred_check
        %p149 = pneg %p99
      $region18: #{_dynamic_linear_pallas.1} parent=11 // pred_check_branch
        %151 = sbr.rel (%p149) target = $region20
      $region19: #{_dynamic_linear_pallas.1} parent=11 // pred_region
        %p152 = scmp.lt.s32.totalorder %s19, 0
        %s153 = scalar_select %p152, %s19, 0
        %s154 = scalar_lea.vmem %s2, %s153
      $region20: #{_dynamic_linear_pallas.1} parent=11 // pred_fallthru
        _
    $region12: #{_dynamic_linear_pallas.1} parent=5 // pred_fallthru
      _
    %p155 = scmp.lt.s32.totalorder %s9, 2
    // Predicated region
    $region21: #{_dynamic_linear_pallas.1} parent=5 // pred_check
      %p156 = pneg %p155
    $region22: #{_dynamic_linear_pallas.1} parent=5 // pred_check_branch
      %158 = sbr.rel (%p156) target = $region24
    $region23: #{_dynamic_linear_pallas.1} parent=5 // pred_region
      // Predicated region
      $region25: #{_dynamic_linear_pallas.1} parent=23 // pred_check
        %p159 = pneg %p41
      $region26: #{_dynamic_linear_pallas.1} parent=23 // pred_check_branch
        %161 = sbr.rel (%p159) target = $region28
      $region27: #{_dynamic_linear_pallas.1} parent=23 // pred_region
        %s162 = smul.u32 4, %s16
        %p163 = scmp.lt.s32.totalorder %s162, 7
        %s164 = scalar_select %p163, %s162, 7
        %s165 = smul.addr %s164, 8
        %s166 = scalar_lea.vmem %s0, %s165
        %s167 = smul.u32 4, %s16
      $region28: #{_dynamic_linear_pallas.1} parent=23 // pred_fallthru
        _
    $region24: #{_dynamic_linear_pallas.1} parent=5 // pred_fallthru
      _
    %p168 = scmp.le.s32.totalorder 1, %s9
    %p169 = scmp.lt.s32.totalorder %s9, 3
    %p170 = pnand %p168, %p169
    %p171 = pneg %p170
    // Predicated region
    $region29: #{_dynamic_linear_pallas.1} parent=5 // pred_check
      _
    $region30: #{_dynamic_linear_pallas.1} parent=5 // pred_check_branch
      %173 = sbr.rel (%p170) target = $region32
    $region31: #{_dynamic_linear_pallas.1} parent=5 // pred_region
      %s174 = ssub.s32 %s9, 1
      %s175 = smul.u32 4, %s18
      %p176 = scmp.lt.s32.totalorder %s175, 7
      %s177 = scalar_select %p176, %s175, 7
      %s178 = smul.addr %s177, 8
      %s179 = scalar_lea.vmem %s0, %s178
      %p180 = pneg %p47
      %p181 = pneg %p44
      %p182 = scmp.lt.s32.totalorder %s19, 0
      %s183 = scalar_select %p182, %s19, 0
      %s184 = smul.addr %s183, 8
      %s185 = scalar_lea.vmem %s1, %s184
      %p186 = pneg %p73
      %p187 = pneg %p70
      %p188 = scmp.lt.s32.totalorder %s19, 0
      %s189 = scalar_select %p188, %s19, 0
      %s190 = scalar_lea.vmem %s2, %s189
      %p191 = pneg %p99
      %p192 = pneg %p96
      %p193 = pneg %p127
      %p194 = pneg %p124
      %s195 = smul.u32 4, %s18
      %p196 = scmp.lt.s32.totalorder %s195, 7
      %s197 = scalar_select %p196, %s195, 7
      %p198 = scmp.lt.s32.totalorder %s19, 0
      %s199 = scalar_select %p198, %s19, 0
      %s200 = sadd.s32 %s199, %s197
      %s201 = smul.addr %s200, 8
      %s202 = scalar_lea.vmem %s3, %s201
      %s203 = smul.u32 4, %s18
      %p204 = scmp.lt.s32.totalorder %s203, 7
      %s205 = scalar_select %p204, %s203, 7
      %s206 = smul.addr %s205, 8
      %s207 = scalar_lea.vmem %s0, %s206
      %s208 = smul.u32 4, %s18
      %p209 = scmp.lt.s32.totalorder %s19, 0
      %s210 = scalar_select %p209, %s19, 0
      %s211 = smul.addr %s210, 8
      %s212 = scalar_lea.vmem %s1, %s211
      %p213 = scmp.lt.s32.totalorder %s19, 0
      %s214 = scalar_select %p213, %s19, 0
      %s215 = scalar_lea.vmem %s2, %s214
      %s216 = smul.u32 4, %s18
      %p217 = scmp.lt.s32.totalorder %s216, 7
      %s218 = scalar_select %p217, %s216, 7
      %p219 = scmp.lt.s32.totalorder %s19, 0
      %s220 = scalar_select %p219, %s19, 0
      %s221 = sadd.s32 %s220, %s218
      %s222 = smul.addr %s221, 8
      %s223 = scalar_lea.vmem %s3, %s222
      %s224 = smul.u32 4, %s18
      %v225 = vld [vmem:[%s207] sm:$0xff]
      %v226 = vld [vmem:[%s207 + $0x8] sm:$0xff]
      %v227 = vld [vmem:[%s207 + $0x10] sm:$0xff]
      %v228 = vld [vmem:[%s207 + $0x18] sm:$0xff]
      %v229 = vld [vmem:[%s212] sm:$0xff]
      %v230 = vld [vmem:[%s212 + $0x8] sm:$0xff]
      %v231 = vld [vmem:[%s212 + $0x10] sm:$0xff]
      %v232 = vld [vmem:[%s215] sm:$0x1]
      %v234 = vperm.slane %v232, 0
      %vm236 = vcmask 195584
      %v238 = vsel %vm236, %v225, 0
      %v241 = vsel %vm236, %v226, 0
      %v244 = vsel %vm236, %v227, 0
      %v247 = vsel %vm236, %v228, 0
      %249 = vmatpush.msra.mxu0 0.0
      %250 = vmatpush.msra.mxu0 0.0
      %251 = vmatpush.msra.mxu0 0.0
      %252 = vmatpush.msra.mxu0 0.0
      %253 = vmatpush.msra.mxu0 0.0
      %254 = vmatpush.msra.mxu0 0.0
      %255 = vmatpush.msra.mxu0 0.0
      %256 = vmatpush.msra.mxu0 0.0
      %257 = vmatpush.msra.mxu0 0.0
      %258 = vmatpush.msra.mxu0 0.0
      %259 = vmatpush.msra.mxu0 0.0
      %260 = vmatpush.msra.mxu0 0.0
      %261 = vmatpush.msra.mxu0 0.0
      %262 = vmatpush.msra.mxu0 %v231
      %263 = vmatpush.msra.mxu0 %v230
      %264 = vmatpush.msra.mxu0 %v229
      %265 = vmatmul.f32.gmra.mxu0 %v238
      %v266 = vpop.f32.mrf.mxu0
      %v267 = vadd.f32 %v234, %v266
      %268 = vmatmul.f32.gmra.mxu0 %v241
      %v269 = vpop.f32.mrf.mxu0
      %v270 = vadd.f32 %v234, %v269
      %271 = vmatmul.f32.gmra.mxu0 %v244
      %v272 = vpop.f32.mrf.mxu0
      %v273 = vadd.f32 %v234, %v272
      %274 = vmatmul.f32.gmra.mxu0 %v247
      %v275 = vpop.f32.mrf.mxu0
      %v276 = vadd.f32 %v234, %v275
      %277 = vdwg.mxu0
      %278 = vst [vmem:[%s223] sm:$0xff] %v267
      %279 = vst [vmem:[%s223 + $0x8] sm:$0xff] %v270
      %280 = vst [vmem:[%s223 + $0x10] sm:$0xff] %v273
      %281 = vst [vmem:[%s223 + $0x18] sm:$0xff] %v276
      %s282 = smul.u32 4, %s18
      %p283 = scmp.lt.s32.totalorder %s282, 7
      %s284 = scalar_select %p283, %s282, 7
      %p285 = scmp.lt.s32.totalorder %s19, 0
      %s286 = scalar_select %p285, %s19, 0
      %s287 = sadd.s32 %s286, %s284
      %s288 = smul.addr %s287, 8
      %s289 = scalar_lea.vmem %s3, %s288
      // Predicated region
      $region33: #{_dynamic_linear_pallas.1} parent=31 // pred_check
        %p290 = pneg %p124
      $region34: #{_dynamic_linear_pallas.1} parent=31 // pred_check_branch
        %292 = sbr.rel (%p290) target = $region36
      $region35: #{_dynamic_linear_pallas.1} parent=31 // pred_region
        %s293 = smul.u32 4, %s18
      $region36: #{_dynamic_linear_pallas.1} parent=31 // pred_fallthru
        _
    $region32: #{_dynamic_linear_pallas.1} parent=5 // pred_fallthru
      _
    %p294 = scmp.le.s32.totalorder 2, %s9
    // Predicated region
    $region37: #{_dynamic_linear_pallas.1} parent=5 // pred_check
      %p295 = pneg %p294
    $region38: #{_dynamic_linear_pallas.1} parent=5 // pred_check_branch
      %297 = sbr.rel (%p295) target = $region40
    $region39: #{_dynamic_linear_pallas.1} parent=5 // pred_region
      %s298 = ssub.s32 %s9, 2
      // Predicated region
      $region41: #{_dynamic_linear_pallas.1} parent=39 // pred_check
        %p299 = pneg %p130
      $region42: #{_dynamic_linear_pallas.1} parent=39 // pred_check_branch
        %301 = sbr.rel (%p299) target = $region44
      $region43: #{_dynamic_linear_pallas.1} parent=39 // pred_region
        %s302 = smul.u32 4, %s20
        %p303 = scmp.lt.s32.totalorder %s302, 7
        %s304 = scalar_select %p303, %s302, 7
        %p305 = scmp.lt.s32.totalorder %s21, 0
        %s306 = scalar_select %p305, %s21, 0
        %s307 = sadd.s32 %s306, %s304
        %s308 = smul.addr %s307, 8
        %s309 = scalar_lea.vmem %s3, %s308
      $region44: #{_dynamic_linear_pallas.1} parent=39 // pred_fallthru
        _
    $region40: #{_dynamic_linear_pallas.1} parent=5 // pred_fallthru
      _
  $region6: #{_dynamic_linear_pallas.1} parent=0 // loop_footer
    %s13 = sadd.s32 1, %s9
  $region7: #{_dynamic_linear_pallas.1} parent=0 // loop_footer_branch
    %8 = sbr.rel target = $region3
  $region8: #{_dynamic_linear_pallas.1} parent=0 // loop_exit
    _

</llo_original>
